<compile_context>
chip_gen: v7x
topology: tpu7x:2x2x1
jax: 0.10.0
libtpu: 0.0.40
codegen_flags: <defaults>
</compile_context>

<pallas_src>
import math
import functools

import jax
import jax.numpy as jnp
from jax import lax
from jax.experimental import pallas as pl
from jax.experimental.pallas import tpu as pltpu


# ---------------------------------------------------------------------------
# Fused kernel: one grid step per batch element.
# ---------------------------------------------------------------------------
def _fused_clip_attn_kernel(x_ref, wqkv_ref, bqkv_ref, wo_ref, bo_ref, o_ref,
                            qkv_ref, attn_ref, *, heads):
    # x_ref:    (1, S, E)  compute dtype
    # wqkv_ref: (E, 3E)    compute dtype (q-scale pre-folded)
    # bqkv_ref: (1, 3E)    f32
    # wo_ref:   (E, E)     compute dtype
    # bo_ref:   (1, E)     f32
    # o_ref:    (1, S, E)  output dtype
    # qkv_ref:  (S, 3E)    VMEM scratch, compute dtype
    # attn_ref: (S, E)     VMEM scratch, compute dtype (lane-dense head merge)
    x = x_ref[0]                                   # (S, E)
    E = x.shape[-1]
    dh = E // heads

    # Fused QKV projection: one MXU matmul with N = 3E, f32 accumulation.
    qkv = jnp.dot(x, wqkv_ref[...], preferred_element_type=jnp.float32)
    qkv = qkv + bqkv_ref[...]                      # (S, 3E) + (1, 3E) broadcast
    qkv_ref[...] = qkv.astype(qkv_ref.dtype)

    # Per-head scaled-dot-product attention, entirely in VMEM/vregs.
    # (1/sqrt(dh) is already folded into wq/bq, so q arrives pre-scaled.)
    # TODO(synk): for dh=64 models on v6e/v7x, process lane-aligned head *pairs*
    #             ((S, 128) chunks) to avoid 64-lane-offset per-head slices.
    for h in range(heads):                         # static loop; scratch stores bound liveness
        q = qkv_ref[:, h * dh:(h + 1) * dh]                    # (S, dh)
        k = qkv_ref[:, E + h * dh:E + (h + 1) * dh]
        v = qkv_ref[:, 2 * E + h * dh:2 * E + (h + 1) * dh]

        # q @ k^T without materializing a transpose: contract the last dims.
        s = lax.dot_general(q, k,
                            dimension_numbers=(((1,), (1,)), ((), ())),
                            preferred_element_type=jnp.float32)         # (S, S) f32
        m = jnp.max(s, axis=-1, keepdims=True)
        p = jnp.exp(s - m)                                               # f32 softmax
        l = jnp.sum(p, axis=-1, keepdims=True)
        o_h = jnp.dot(p.astype(v.dtype), v,
                      preferred_element_type=jnp.float32)                # (S, dh)
        # Deferred normalization on the small (S, dh) output; approx reciprocal
        # lowers to the otherwise-idle EUP slot.
        inv_l = pl.reciprocal(l, approx=True)
        attn_ref[:, h * dh:(h + 1) * dh] = (o_h * inv_l).astype(attn_ref.dtype)

    # Output projection from the lane-dense (S, E) scratch.
    out = jnp.dot(attn_ref[...], wo_ref[...], preferred_element_type=jnp.float32)
    out = out + bo_ref[...]
    o_ref[0] = out.astype(o_ref.dtype)


# ---------------------------------------------------------------------------
# Wrappers
# ---------------------------------------------------------------------------
def fuse_clip_attn_params(params, heads):
    """Fold wq/wk/wv into one (E, 3E) weight + (3E,) bias and pre-fold the
    1/sqrt(dh) attention scale into the q weights/bias (done once, offline)."""
    E = params["wq"].shape[0]
    assert E % heads == 0
    scale = 1.0 / math.sqrt(E // heads)
    wqkv = jnp.concatenate(
        [params["wq"] * scale, params["wk"], params["wv"]], axis=1)
    bqkv = jnp.concatenate(
        [params["bq"] * scale, params["bk"], params["bv"]], axis=0)
    return {"wqkv": wqkv, "bqkv": bqkv, "wo": params["wo"], "bo": params["bo"]}


def _vmem_limit_bytes(S, E, compute_dtype):
    """Scoped-VMEM limit sized to the actual working set (+25% headroom)."""
    cs = jnp.dtype(compute_dtype).itemsize
    weights = (3 * E * E + E * E) * cs + (3 * E + E) * 4   # Buffered(1) weights + f32 biases
    io = 2 * 2 * S * E * cs                                # x + out, double-buffered
    scratch = (3 * S * E + S * E) * cs                     # qkv + attn scratches
    attn_tmp = 3 * S * S * 4                               # live f32 score/prob tiles
    need = int((weights + io + scratch + attn_tmp) * 1.25)
    return int(min(max(need, 32 * 1024 * 1024), 100 * 1024 * 1024))


def clip_attention(x, fused_params, heads, mask=None, compute_dtype=jnp.bfloat16):
    """x: (B, S, E). fused_params: {'wqkv': (E,3E), 'bqkv': (3E,), 'wo': (E,E), 'bo': (E,)}.

    MXU operands are cast to `compute_dtype` (bf16 by default: ~2x MXU throughput,
    half the HBM/VMEM weight footprint); accumulation and softmax stay f32.
    The result is returned in x's original dtype.
    """
    assert mask is None  # TODO(synk): attn_mask support (add to scores pre-softmax)
    B, S, E = x.shape
    assert E % heads == 0
    out_dtype = x.dtype

    xc = x.astype(compute_dtype)
    wqkv = fused_params["wqkv"].astype(compute_dtype)
    wo = fused_params["wo"].astype(compute_dtype)
    bqkv = fused_params["bqkv"].astype(jnp.float32).reshape(1, 3 * E)
    bo = fused_params["bo"].astype(jnp.float32).reshape(1, E)

    kernel = functools.partial(_fused_clip_attn_kernel, heads=heads)
    resident = pl.Buffered(1)   # grid-invariant: fetch once, keep a single resident buffer
    return pl.pallas_call(
        kernel,
        out_shape=jax.ShapeDtypeStruct((B, S, E), out_dtype),
        grid_spec=pltpu.PrefetchScalarGridSpec(
            num_scalar_prefetch=0,
            grid=(B,),
            in_specs=[
                pl.BlockSpec((1, S, E), lambda b: (b, 0, 0)),                        # x
                pl.BlockSpec((E, 3 * E), lambda b: (0, 0), pipeline_mode=resident),  # wqkv
                pl.BlockSpec((1, 3 * E), lambda b: (0, 0), pipeline_mode=resident),  # bqkv
                pl.BlockSpec((E, E), lambda b: (0, 0), pipeline_mode=resident),      # wo
                pl.BlockSpec((1, E), lambda b: (0, 0), pipeline_mode=resident),      # bo
            ],
            out_specs=pl.BlockSpec((1, S, E), lambda b: (b, 0, 0)),
            scratch_shapes=[
                pltpu.VMEM((S, 3 * E), compute_dtype),   # qkv projection result
                pltpu.VMEM((S, E), compute_dtype),       # merged head outputs (lane-dense)
            ],
        ),
        compiler_params=pltpu.CompilerParams(
            # B >= 2 (or a second parallel axis) keeps both v7x TensorCores busy.
            dimension_semantics=("parallel",),
            vmem_limit_bytes=_vmem_limit_bytes(S, E, compute_dtype),
        ),
    )(xc, wqkv, bqkv, wo, bo)


# ---------------------------------------------------------------------------
# Pure-JAX reference (mirrors the PyTorch module with un-fused weights)
# ---------------------------------------------------------------------------
def clip_attention_ref(x, params, heads):
    B, S, E = x.shape
    dh = E // heads
    q = x @ params["wq"] + params["bq"]
    k = x @ params["wk"] + params["bk"]
    v = x @ params["wv"] + params["bv"]

    def split_heads(t):
        return jnp.transpose(t.reshape(B, S, heads, dh), (0, 2, 1, 3))

    qh, kh, vh = split_heads(q), split_heads(k), split_heads(v)
    s = jnp.einsum("bhqd,bhkd->bhqk", qh, kh) / math.sqrt(dh)
    p = jax.nn.softmax(s, axis=-1)
    o = jnp.einsum("bhqk,bhkd->bhqd", p, vh)
    o = jnp.transpose(o, (0, 2, 1, 3)).reshape(B, S, E)
    return o @ params["wo"] + params["bo"]


if __name__ == "__main__":
    B, S, E, HEADS = 2, 8, 32, 4
    dtype = jnp.float32

    key = jax.random.PRNGKey(0)
    keys = jax.random.split(key, 9)

    # Weights stored pre-transposed: (E_in, E_out), so y = x @ W + b matches
    # torch nn.Linear with weight W.T.
    def init_w(k):
        return (jax.random.normal(k, (E, E), dtype) * 0.05).astype(dtype)

    def init_b(k):
        return (jax.random.normal(k, (E,), dtype) * 0.01).astype(dtype)

    params = {
        "wq": init_w(keys[0]), "bq": init_b(keys[1]),
        "wk": init_w(keys[2]), "bk": init_b(keys[3]),
        "wv": init_w(keys[4]), "bv": init_b(keys[5]),
        "wo": init_w(keys[6]), "bo": init_b(keys[7]),
    }
    fused = fuse_clip_attn_params(params, HEADS)
    x = jax.random.normal(keys[8], (B, S, E), dtype)

    ref = clip_attention_ref(x, params, HEADS)

    # f32 operand path (tight check; tolerance admits the approx softmax reciprocal).
    out_f32 = jax.block_until_ready(
        clip_attention(x, fused, HEADS, compute_dtype=jnp.float32))
    assert out_f32.shape == (B, S, E)
    assert jnp.allclose(out_f32, ref, atol=2e-3, rtol=2e-3), "f32 path mismatch"

    # bf16 operand path (default: f32 accumulation + f32 softmax; looser tolerance).
    out_bf16 = jax.block_until_ready(
        clip_attention(x, fused, HEADS, compute_dtype=jnp.bfloat16))
    assert out_bf16.shape == (B, S, E)
    assert jnp.allclose(out_bf16, ref, atol=3e-2, rtol=3e-2), "bf16 path mismatch"

    print("KERNEL_OK")
</pallas_src>

<mosaic_0001>
module attributes {stable_mosaic.version = 11 : i64} {
  func.func @_fused_clip_attn_kernel(%arg0: i32, %arg1: memref<1x8x32xf32, #tpu.memory_space<vmem>>, %arg2: memref<32x96xf32, #tpu.memory_space<vmem>>, %arg3: memref<1x96xf32, #tpu.memory_space<vmem>>, %arg4: memref<32x32xf32, #tpu.memory_space<vmem>>, %arg5: memref<1x32xf32, #tpu.memory_space<vmem>>, %arg6: memref<1x8x32xf32, #tpu.memory_space<vmem>>, %arg7: memref<8x96xf32, #tpu.memory_space<vmem>>, %arg8: memref<8x32xf32, #tpu.memory_space<vmem>>) attributes {dimension_semantics = [#tpu.dimension_semantics<parallel>], iteration_bounds = array<i64: 2>, scalar_prefetch = 0 : i64, scratch_operands = 2 : i64, tpu.core_type = #tpu.core_type<tc>, window_params = [{transform_indices = @transform_0, window_bounds = array<i64: 1, 8, 32>}, {pipeline_mode = #tpu.pipeline_mode<synchronous>, transform_indices = @transform_1, window_bounds = array<i64: 32, 96>}, {pipeline_mode = #tpu.pipeline_mode<synchronous>, transform_indices = @transform_2, window_bounds = array<i64: 1, 96>}, {pipeline_mode = #tpu.pipeline_mode<synchronous>, transform_indices = @transform_3, window_bounds = array<i64: 32, 32>}, {pipeline_mode = #tpu.pipeline_mode<synchronous>, transform_indices = @transform_4, window_bounds = array<i64: 1, 32>}, {transform_indices = @transform_5, window_bounds = array<i64: 1, 8, 32>}]} {
    %c0 = arith.constant 0 : index
    %c0_0 = arith.constant 0 : index
    %c0_1 = arith.constant 0 : index
    %0 = vector.load %arg1[%c0, %c0_0, %c0_1] : memref<1x8x32xf32, #tpu.memory_space<vmem>>, vector<1x8x32xf32>
    %1 = vector.shape_cast %0 : vector<1x8x32xf32> to vector<8x32xf32>
    %c0_2 = arith.constant 0 : index
    %c0_3 = arith.constant 0 : index
    %2 = vector.load %arg2[%c0_2, %c0_3] : memref<32x96xf32, #tpu.memory_space<vmem>>, vector<32x96xf32>
    %cst = arith.constant dense<0.000000e+00> : vector<8x96xf32>
    %3 = tpu.matmul %1, %2, %cst {dimension_numbers = #tpu.dot_dimension_numbers<[1], [0], [0], [1], [0, 0, 1, 1], [], []>} : vector<8x32xf32>, vector<32x96xf32>, vector<8x96xf32> -> vector<8x96xf32>
    %c0_4 = arith.constant 0 : index
    %c0_5 = arith.constant 0 : index
    %4 = vector.load %arg3[%c0_4, %c0_5] : memref<1x96xf32, #tpu.memory_space<vmem>>, vector<1x96xf32>
    %5 = vector.broadcast %4 : vector<1x96xf32> to vector<8x96xf32>
    %6 = arith.addf %3, %5 : vector<8x96xf32>
    %c0_6 = arith.constant 0 : index
    %c0_7 = arith.constant 0 : index
    %7 = vector.load %arg7[%c0_6, %c0_7] : memref<8x96xf32, #tpu.memory_space<vmem>>, vector<8x96xf32>
    tpu.vector_store %arg7[%c0_6, %c0_7], %6 {strides = array<i32>} : memref<8x96xf32, #tpu.memory_space<vmem>>, vector<8x96xf32>,
    %c0_8 = arith.constant 0 : index
    %c0_9 = arith.constant 0 : index
    %8 = vector.load %arg7[%c0_8, %c0_9] : memref<8x96xf32, #tpu.memory_space<vmem>>, vector<8x8xf32>
    %c0_10 = arith.constant 0 : index
    %c32 = arith.constant 32 : index
    %9 = vector.load %arg7[%c0_10, %c32] : memref<8x96xf32, #tpu.memory_space<vmem>>, vector<8x8xf32>
    %c0_11 = arith.constant 0 : index
    %c64 = arith.constant 64 : index
    %10 = vector.load %arg7[%c0_11, %c64] : memref<8x96xf32, #tpu.memory_space<vmem>>, vector<8x8xf32>
    %cst_12 = arith.constant dense<0.000000e+00> : vector<8x8xf32>
    %11 = tpu.matmul %8, %9, %cst_12 {dimension_numbers = #tpu.dot_dimension_numbers<[1], [1], [0], [0], [0, 0, 1, 0], [], []>} : vector<8x8xf32>, vector<8x8xf32>, vector<8x8xf32> -> vector<8x8xf32>
    %cst_13 = arith.constant dense<0xFF800000> : vector<8xf32>
    %12 = vector.multi_reduction <maximumf>, %11, %cst_13 [1] : vector<8x8xf32> to vector<8xf32>
    %13 = vector.shape_cast %12 : vector<8xf32> to vector<8x1xf32>
    %14 = vector.broadcast %13 : vector<8x1xf32> to vector<8x8xf32>
    %15 = arith.subf %11, %14 : vector<8x8xf32>
    %16 = math.exp %15 : vector<8x8xf32>
    %cst_14 = arith.constant dense<0.000000e+00> : vector<8xf32>
    %17 = vector.multi_reduction <add>, %16, %cst_14 [1] : vector<8x8xf32> to vector<8xf32>
    %18 = vector.shape_cast %17 : vector<8xf32> to vector<8x1xf32>
    %cst_15 = arith.constant dense<0.000000e+00> : vector<8x8xf32>
    %19 = tpu.matmul %16, %10, %cst_15 {dimension_numbers = #tpu.dot_dimension_numbers<[1], [0], [0], [1], [0, 0, 1, 1], [], []>} : vector<8x8xf32>, vector<8x8xf32>, vector<8x8xf32> -> vector<8x8xf32>
    %20 = tpu.reciprocal %18 {approx = true} : vector<8x1xf32> -> vector<8x1xf32>
    %21 = vector.broadcast %20 : vector<8x1xf32> to vector<8x8xf32>
    %22 = arith.mulf %19, %21 : vector<8x8xf32>
    %c0_16 = arith.constant 0 : index
    %c0_17 = arith.constant 0 : index
    %23 = vector.load %arg8[%c0_16, %c0_17] : memref<8x32xf32, #tpu.memory_space<vmem>>, vector<8x8xf32>
    tpu.vector_store %arg8[%c0_16, %c0_17], %22 {strides = array<i32>} : memref<8x32xf32, #tpu.memory_space<vmem>>, vector<8x8xf32>,
    %c0_18 = arith.constant 0 : index
    %c8 = arith.constant 8 : index
    %24 = vector.load %arg7[%c0_18, %c8] : memref<8x96xf32, #tpu.memory_space<vmem>>, vector<8x8xf32>
    %c0_19 = arith.constant 0 : index
    %c40 = arith.constant 40 : index
    %25 = vector.load %arg7[%c0_19, %c40] : memref<8x96xf32, #tpu.memory_space<vmem>>, vector<8x8xf32>
    %c0_20 = arith.constant 0 : index
    %c72 = arith.constant 72 : index
    %26 = vector.load %arg7[%c0_20, %c72] : memref<8x96xf32, #tpu.memory_space<vmem>>, vector<8x8xf32>
    %cst_21 = arith.constant dense<0.000000e+00> : vector<8x8xf32>
    %27 = tpu.matmul %24, %25, %cst_21 {dimension_numbers = #tpu.dot_dimension_numbers<[1], [1], [0], [0], [0, 0, 1, 0], [], []>} : vector<8x8xf32>, vector<8x8xf32>, vector<8x8xf32> -> vector<8x8xf32>
    %cst_22 = arith.constant dense<0xFF800000> : vector<8xf32>
    %28 = vector.multi_reduction <maximumf>, %27, %cst_22 [1] : vector<8x8xf32> to vector<8xf32>
    %29 = vector.shape_cast %28 : vector<8xf32> to vector<8x1xf32>
    %30 = vector.broadcast %29 : vector<8x1xf32> to vector<8x8xf32>
    %31 = arith.subf %27, %30 : vector<8x8xf32>
    %32 = math.exp %31 : vector<8x8xf32>
    %cst_23 = arith.constant dense<0.000000e+00> : vector<8xf32>
    %33 = vector.multi_reduction <add>, %32, %cst_23 [1] : vector<8x8xf32> to vector<8xf32>
    %34 = vector.shape_cast %33 : vector<8xf32> to vector<8x1xf32>
    %cst_24 = arith.constant dense<0.000000e+00> : vector<8x8xf32>
    %35 = tpu.matmul %32, %26, %cst_24 {dimension_numbers = #tpu.dot_dimension_numbers<[1], [0], [0], [1], [0, 0, 1, 1], [], []>} : vector<8x8xf32>, vector<8x8xf32>, vector<8x8xf32> -> vector<8x8xf32>
    %36 = tpu.reciprocal %34 {approx = true} : vector<8x1xf32> -> vector<8x1xf32>
    %37 = vector.broadcast %36 : vector<8x1xf32> to vector<8x8xf32>
    %38 = arith.mulf %35, %37 : vector<8x8xf32>
    %c0_25 = arith.constant 0 : index
    %c8_26 = arith.constant 8 : index
    %39 = vector.load %arg8[%c0_25, %c8_26] : memref<8x32xf32, #tpu.memory_space<vmem>>, vector<8x8xf32>
    tpu.vector_store %arg8[%c0_25, %c8_26], %38 {strides = array<i32>} : memref<8x32xf32, #tpu.memory_space<vmem>>, vector<8x8xf32>,
    %c0_27 = arith.constant 0 : index
    %c16 = arith.constant 16 : index
    %40 = vector.load %arg7[%c0_27, %c16] : memref<8x96xf32, #tpu.memory_space<vmem>>, vector<8x8xf32>
    %c0_28 = arith.constant 0 : index
    %c48 = arith.constant 48 : index
    %41 = vector.load %arg7[%c0_28, %c48] : memref<8x96xf32, #tpu.memory_space<vmem>>, vector<8x8xf32>
    %c0_29 = arith.constant 0 : index
    %c80 = arith.constant 80 : index
    %42 = vector.load %arg7[%c0_29, %c80] : memref<8x96xf32, #tpu.memory_space<vmem>>, vector<8x8xf32>
    %cst_30 = arith.constant dense<0.000000e+00> : vector<8x8xf32>
    %43 = tpu.matmul %40, %41, %cst_30 {dimension_numbers = #tpu.dot_dimension_numbers<[1], [1], [0], [0], [0, 0, 1, 0], [], []>} : vector<8x8xf32>, vector<8x8xf32>, vector<8x8xf32> -> vector<8x8xf32>
    %cst_31 = arith.constant dense<0xFF800000> : vector<8xf32>
    %44 = vector.multi_reduction <maximumf>, %43, %cst_31 [1] : vector<8x8xf32> to vector<8xf32>
    %45 = vector.shape_cast %44 : vector<8xf32> to vector<8x1xf32>
    %46 = vector.broadcast %45 : vector<8x1xf32> to vector<8x8xf32>
    %47 = arith.subf %43, %46 : vector<8x8xf32>
    %48 = math.exp %47 : vector<8x8xf32>
    %cst_32 = arith.constant dense<0.000000e+00> : vector<8xf32>
    %49 = vector.multi_reduction <add>, %48, %cst_32 [1] : vector<8x8xf32> to vector<8xf32>
    %50 = vector.shape_cast %49 : vector<8xf32> to vector<8x1xf32>
    %cst_33 = arith.constant dense<0.000000e+00> : vector<8x8xf32>
    %51 = tpu.matmul %48, %42, %cst_33 {dimension_numbers = #tpu.dot_dimension_numbers<[1], [0], [0], [1], [0, 0, 1, 1], [], []>} : vector<8x8xf32>, vector<8x8xf32>, vector<8x8xf32> -> vector<8x8xf32>
    %52 = tpu.reciprocal %50 {approx = true} : vector<8x1xf32> -> vector<8x1xf32>
    %53 = vector.broadcast %52 : vector<8x1xf32> to vector<8x8xf32>
    %54 = arith.mulf %51, %53 : vector<8x8xf32>
    %c0_34 = arith.constant 0 : index
    %c16_35 = arith.constant 16 : index
    %55 = vector.load %arg8[%c0_34, %c16_35] : memref<8x32xf32, #tpu.memory_space<vmem>>, vector<8x8xf32>
    tpu.vector_store %arg8[%c0_34, %c16_35], %54 {strides = array<i32>} : memref<8x32xf32, #tpu.memory_space<vmem>>, vector<8x8xf32>,
    %c0_36 = arith.constant 0 : index
    %c24 = arith.constant 24 : index
    %56 = vector.load %arg7[%c0_36, %c24] : memref<8x96xf32, #tpu.memory_space<vmem>>, vector<8x8xf32>
    %c0_37 = arith.constant 0 : index
    %c56 = arith.constant 56 : index
    %57 = vector.load %arg7[%c0_37, %c56] : memref<8x96xf32, #tpu.memory_space<vmem>>, vector<8x8xf32>
    %c0_38 = arith.constant 0 : index
    %c88 = arith.constant 88 : index
    %58 = vector.load %arg7[%c0_38, %c88] : memref<8x96xf32, #tpu.memory_space<vmem>>, vector<8x8xf32>
    %cst_39 = arith.constant dense<0.000000e+00> : vector<8x8xf32>
    %59 = tpu.matmul %56, %57, %cst_39 {dimension_numbers = #tpu.dot_dimension_numbers<[1], [1], [0], [0], [0, 0, 1, 0], [], []>} : vector<8x8xf32>, vector<8x8xf32>, vector<8x8xf32> -> vector<8x8xf32>
    %cst_40 = arith.constant dense<0xFF800000> : vector<8xf32>
    %60 = vector.multi_reduction <maximumf>, %59, %cst_40 [1] : vector<8x8xf32> to vector<8xf32>
    %61 = vector.shape_cast %60 : vector<8xf32> to vector<8x1xf32>
    %62 = vector.broadcast %61 : vector<8x1xf32> to vector<8x8xf32>
    %63 = arith.subf %59, %62 : vector<8x8xf32>
    %64 = math.exp %63 : vector<8x8xf32>
    %cst_41 = arith.constant dense<0.000000e+00> : vector<8xf32>
    %65 = vector.multi_reduction <add>, %64, %cst_41 [1] : vector<8x8xf32> to vector<8xf32>
    %66 = vector.shape_cast %65 : vector<8xf32> to vector<8x1xf32>
    %cst_42 = arith.constant dense<0.000000e+00> : vector<8x8xf32>
    %67 = tpu.matmul %64, %58, %cst_42 {dimension_numbers = #tpu.dot_dimension_numbers<[1], [0], [0], [1], [0, 0, 1, 1], [], []>} : vector<8x8xf32>, vector<8x8xf32>, vector<8x8xf32> -> vector<8x8xf32>
    %68 = tpu.reciprocal %66 {approx = true} : vector<8x1xf32> -> vector<8x1xf32>
    %69 = vector.broadcast %68 : vector<8x1xf32> to vector<8x8xf32>
    %70 = arith.mulf %67, %69 : vector<8x8xf32>
    %c0_43 = arith.constant 0 : index
    %c24_44 = arith.constant 24 : index
    %71 = vector.load %arg8[%c0_43, %c24_44] : memref<8x32xf32, #tpu.memory_space<vmem>>, vector<8x8xf32>
    tpu.vector_store %arg8[%c0_43, %c24_44], %70 {strides = array<i32>} : memref<8x32xf32, #tpu.memory_space<vmem>>, vector<8x8xf32>,
    %c0_45 = arith.constant 0 : index
    %c0_46 = arith.constant 0 : index
    %72 = vector.load %arg8[%c0_45, %c0_46] : memref<8x32xf32, #tpu.memory_space<vmem>>, vector<8x32xf32>
    %c0_47 = arith.constant 0 : index
    %c0_48 = arith.constant 0 : index
    %73 = vector.load %arg4[%c0_47, %c0_48] : memref<32x32xf32, #tpu.memory_space<vmem>>, vector<32x32xf32>
    %cst_49 = arith.constant dense<0.000000e+00> : vector<8x32xf32>
    %74 = tpu.matmul %72, %73, %cst_49 {dimension_numbers = #tpu.dot_dimension_numbers<[1], [0], [0], [1], [0, 0, 1, 1], [], []>} : vector<8x32xf32>, vector<32x32xf32>, vector<8x32xf32> -> vector<8x32xf32>
    %c0_50 = arith.constant 0 : index
    %c0_51 = arith.constant 0 : index
    %75 = vector.load %arg5[%c0_50, %c0_51] : memref<1x32xf32, #tpu.memory_space<vmem>>, vector<1x32xf32>
    %76 = vector.broadcast %75 : vector<1x32xf32> to vector<8x32xf32>
    %77 = arith.addf %74, %76 : vector<8x32xf32>
    %c0_52 = arith.constant 0 : index
    %c0_53 = arith.constant 0 : index
    %c0_54 = arith.constant 0 : index
    %78 = vector.load %arg6[%c0_52, %c0_53, %c0_54] : memref<1x8x32xf32, #tpu.memory_space<vmem>>, vector<1x8x32xf32>
    %79 = vector.shape_cast %78 : vector<1x8x32xf32> to vector<8x32xf32>
    %80 = vector.shape_cast %77 : vector<8x32xf32> to vector<1x8x32xf32>
    tpu.vector_store %arg6[%c0_52, %c0_53, %c0_54], %80 {strides = array<i32>} : memref<1x8x32xf32, #tpu.memory_space<vmem>>, vector<1x8x32xf32>,
    return
  }
  func.func @transform_0(%arg0: i32) -> (i32, i32, i32) {
    %c0_i32 = arith.constant 0 : i32
    %c0_i32_0 = arith.constant 0 : i32
    %c0_i32_1 = arith.constant 0 : i32
    return %arg0, %c0_i32, %c0_i32_0 : i32, i32, i32
  }
  func.func @transform_1(%arg0: i32) -> (i32, i32) {
    %c0_i32 = arith.constant 0 : i32
    %c0_i32_0 = arith.constant 0 : i32
    %c0_i32_1 = arith.constant 0 : i32
    return %c0_i32, %c0_i32_0 : i32, i32
  }
  func.func @transform_2(%arg0: i32) -> (i32, i32) {
    %c0_i32 = arith.constant 0 : i32
    %c0_i32_0 = arith.constant 0 : i32
    %c0_i32_1 = arith.constant 0 : i32
    return %c0_i32, %c0_i32_0 : i32, i32
  }
  func.func @transform_3(%arg0: i32) -> (i32, i32) {
    %c0_i32 = arith.constant 0 : i32
    %c0_i32_0 = arith.constant 0 : i32
    %c0_i32_1 = arith.constant 0 : i32
    return %c0_i32, %c0_i32_0 : i32, i32
  }
  func.func @transform_4(%arg0: i32) -> (i32, i32) {
    %c0_i32 = arith.constant 0 : i32
    %c0_i32_0 = arith.constant 0 : i32
    %c0_i32_1 = arith.constant 0 : i32
    return %c0_i32, %c0_i32_0 : i32, i32
  }
  func.func @transform_5(%arg0: i32) -> (i32, i32, i32) {
    %c0_i32 = arith.constant 0 : i32
    %c0_i32_0 = arith.constant 0 : i32
    %c0_i32_1 = arith.constant 0 : i32
    return %arg0, %c0_i32, %c0_i32_0 : i32, i32, i32
  }
}

</mosaic_0001>

<llo_original>
// kernel: tpu_custom_call.1
$region0: #{tpu_custom_call.1}
  #allocation0 [shape = 'u32[]', space=smem, size = 0x4, offset = 0x4, fixed_abs, tag = 'smem constant byte address 0x4 - core index']
  #allocation1 [shape = 'u32[144,128]{1,0:T(1,128)}', space=vmem, size = 0x12000, scoped, tag = 'internal scratch']
  #allocation2 [shape = 'f32[8,96]{1,0:T(8,128)}', space=vmem, size = 0x1000, scoped, tag = 'scratch operand']
  #allocation3 [shape = 'f32[8,32]{1,0:T(8,128)}', space=vmem, size = 0x1000, scoped, tag = 'scratch operand']
  %s0 = inlined_call_operand.hbm [shape: f32[2,8,32], index: 0, kind: input, shape index: {}]
  %s1 = inlined_call_operand.hbm [shape: f32[32,96], index: 1, kind: input, shape index: {}]
  %s2 = inlined_call_operand.vmem [shape: f32[1,96], index: 2, kind: input, shape index: {}]
  %s3 = inlined_call_operand.hbm [shape: f32[32,32], index: 3, kind: input, shape index: {}]
  %s4 = inlined_call_operand.vmem [shape: f32[1,32], index: 4, kind: input, shape index: {}]
  %s5 = inlined_call_operand.hbm [shape: f32[2,8,32], index: 5, kind: output, shape index: {}]
  %s6 = sld [smem:[#allocation0]]
  $region65: #{tpu_custom_call.1} parent=0
    _
  %s8 = ssub.s32 1, %s6
  %s9 = scalar_select 0, %s8, %s6
  $region1: #{tpu_custom_call.1} parent=0
    #allocation4 [shape = 'u8[8192]{0}', space=vmem, size = 0x2000, scoped, tag = 'input window, operand 0']
    #allocation5 [shape = 's32[2]{0}', space=sflag, size = 0x8, scoped, tag = 'scoped memory for tpu_custom_call.1']
    #allocation6 [shape = 's32[2]{0}', space=sflag, size = 0x8, scoped, tag = 'scoped memory for tpu_custom_call.1']
    #allocation7 [shape = 'u8[16384]{0}', space=vmem, size = 0x4000, scoped, tag = 'input window, operand 1, single buffered']
    #allocation8 [shape = 's32[1]{0}', space=sflag, size = 0x4, scoped, tag = 'scoped memory for tpu_custom_call.1']
    #allocation9 [shape = 'u8[16384]{0}', space=vmem, size = 0x4000, scoped, tag = 'input window, operand 3, single buffered']
    #allocation10 [shape = 'u8[8192]{0}', space=vmem, size = 0x2000, scoped, tag = 'output window, operand 0']
    %10 = vsyncpa [#allocation5], 0
    %s11 = scalar_lea.sflag [#allocation5], 1
    %12 = vsyncpa %s11, 0
    %13 = vsyncpa [#allocation8], 0
    %14 = vsyncpa [#allocation6], 0
    %s15 = scalar_lea.sflag [#allocation6], 1
    %16 = vsyncpa %s15, 0
    loop: start=0, step=1, limit=4
    $region2: #{tpu_custom_call.1} parent=1 // loop_pre_header
      _
    $region3: #{tpu_custom_call.1} parent=1 // loop_header
      %s18 = sphi 0, %s22
      %p19 = scmp.ge.s32.totalorder %s18, 4
      %s28 = sphi 0, %s30
      %s31 = sphi 0, %s28
      %s32 = sphi 0, %s31
      %s48 = sphi 0, %s32
      %s52 = sphi 0, %s52
      %s54 = sphi 0, %s52
      %s55 = sphi 0, %s54
      %s69 = sphi 0, %s55
      %s73 = sphi 0, %s73
      %s75 = sphi 0, %s73
      %s76 = sphi 0, %s75
      %s90 = sphi 0, %s76
      %s94 = sphi 0, %s94
      %s96 = sphi 0, %s94
      %s97 = sphi 0, %s96
      %s111 = sphi 0, %s97
      %s115 = sphi 0, %s115
      %s117 = sphi 0, %s115
      %s118 = sphi 0, %s117
      %s132 = sphi 0, %s118
      %s138 = sphi 0, %s140
      %s141 = sphi 0, %s138
      %s142 = sphi 0, %s141
      %s158 = sphi 0, %s142
    $region4: #{tpu_custom_call.1} parent=1 // loop_header_branch
      %21 = sbr.rel (%p19) target = $region8
    $region5: #{tpu_custom_call.1} parent=1 // loop_body
      %s23 = ssub.s32 %s18, 1
      %s24 = ssub.s32 %s18, 2
      %s25 = sadd.s32 %s18, 1
      %s26 = ssub.s32 %s18, %s25
      %p27 = scmp.eq.s32.totalorder %s26, 0
      %s29 = sadd.s32 %s28, 1
      %s30 = scalar_select %p27, %s28, %s29
      %p33 = pneg %p27
      %p34 = scmp.eq.s32.totalorder %s18, 1
      %p35 = por %p33, %p34
      %p36 = scmp.ne.s32.totalorder %s28, %s31
      %p37 = scmp.eq.s32.totalorder %s18, 0
      %p38 = por %p36, %p37
      %p39 = scmp.ne.s32.totalorder %s28, %s31
      %p40 = scmp.eq.s32.totalorder %s23, 1
      %p41 = por %p39, %p40
      %p42 = scmp.ne.s32.totalorder %s31, %s32
      %p43 = scmp.eq.s32.totalorder %s23, 0
      %p44 = por %p42, %p43
      %p45 = scmp.ne.s32.totalorder %s31, %s32
      %p46 = scmp.eq.s32.totalorder %s24, 1
      %p47 = por %p45, %p46
      %p49 = scmp.ne.s32.totalorder %s32, %s48
      %p50 = scmp.eq.s32.totalorder %s24, 0
      %p51 = por %p49, %p50
      %s53 = sadd.s32 %s52, 1
      %p56 = scmp.eq.s32.totalorder %s18, 1
      %p57 = scmp.ne.s32.totalorder %s52, %s54
      %p58 = scmp.eq.s32.totalorder %s18, 0
      %p59 = por %p57, %p58
      %p60 = scmp.ne.s32.totalorder %s52, %s54
      %p61 = scmp.eq.s32.totalorder %s23, 1
      %p62 = por %p60, %p61
      %p63 = scmp.ne.s32.totalorder %s54, %s55
      %p64 = scmp.eq.s32.totalorder %s23, 0
      %p65 = por %p63, %p64
      %p66 = scmp.ne.s32.totalorder %s54, %s55
      %p67 = scmp.eq.s32.totalorder %s24, 1
      %p68 = por %p66, %p67
      %p70 = scmp.ne.s32.totalorder %s55, %s69
      %p71 = scmp.eq.s32.totalorder %s24, 0
      %p72 = por %p70, %p71
      %s74 = sadd.s32 %s73, 1
      %p77 = scmp.eq.s32.totalorder %s18, 1
      %p78 = scmp.ne.s32.totalorder %s73, %s75
      %p79 = scmp.eq.s32.totalorder %s18, 0
      %p80 = por %p78, %p79
      %p81 = scmp.ne.s32.totalorder %s73, %s75
      %p82 = scmp.eq.s32.totalorder %s23, 1
      %p83 = por %p81, %p82
      %p84 = scmp.ne.s32.totalorder %s75, %s76
      %p85 = scmp.eq.s32.totalorder %s23, 0
      %p86 = por %p84, %p85
      %p87 = scmp.ne.s32.totalorder %s75, %s76
      %p88 = scmp.eq.s32.totalorder %s24, 1
      %p89 = por %p87, %p88
      %p91 = scmp.ne.s32.totalorder %s76, %s90
      %p92 = scmp.eq.s32.totalorder %s24, 0
      %p93 = por %p91, %p92
      %s95 = sadd.s32 %s94, 1
      %p98 = scmp.eq.s32.totalorder %s18, 1
      %p99 = scmp.ne.s32.totalorder %s94, %s96
      %p100 = scmp.eq.s32.totalorder %s18, 0
      %p101 = por %p99, %p100
      %p102 = scmp.ne.s32.totalorder %s94, %s96
      %p103 = scmp.eq.s32.totalorder %s23, 1
      %p104 = por %p102, %p103
      %p105 = scmp.ne.s32.totalorder %s96, %s97
      %p106 = scmp.eq.s32.totalorder %s23, 0
      %p107 = por %p105, %p106
      %p108 = scmp.ne.s32.totalorder %s96, %s97
      %p109 = scmp.eq.s32.totalorder %s24, 1
      %p110 = por %p108, %p109
      %p112 = scmp.ne.s32.totalorder %s97, %s111
      %p113 = scmp.eq.s32.totalorder %s24, 0
      %p114 = por %p112, %p113
      %s116 = sadd.s32 %s115, 1
      %p119 = scmp.eq.s32.totalorder %s18, 1
      %p120 = scmp.ne.s32.totalorder %s115, %s117
      %p121 = scmp.eq.s32.totalorder %s18, 0
      %p122 = por %p120, %p121
      %p123 = scmp.ne.s32.totalorder %s115, %s117
      %p124 = scmp.eq.s32.totalorder %s23, 1
      %p125 = por %p123, %p124
      %p126 = scmp.ne.s32.totalorder %s117, %s118
      %p127 = scmp.eq.s32.totalorder %s23, 0
      %p128 = por %p126, %p127
      %p129 = scmp.ne.s32.totalorder %s117, %s118
      %p130 = scmp.eq.s32.totalorder %s24, 1
      %p131 = por %p129, %p130
      %p133 = scmp.ne.s32.totalorder %s118, %s132
      %p134 = scmp.eq.s32.totalorder %s24, 0
      %p135 = por %p133, %p134
      %s136 = ssub.s32 %s18, %s25
      %p137 = scmp.eq.s32.totalorder %s136, 0
      %s139 = sadd.s32 %s138, 1
      %s140 = scalar_select %p137, %s138, %s139
      %p143 = pneg %p137
      %p144 = scmp.eq.s32.totalorder %s18, 1
      %p145 = por %p143, %p144
      %p146 = scmp.ne.s32.totalorder %s138, %s141
      %p147 = scmp.eq.s32.totalorder %s18, 0
      %p148 = por %p146, %p147
      %p149 = scmp.ne.s32.totalorder %s138, %s141
      %p150 = scmp.eq.s32.totalorder %s23, 1
      %p151 = por %p149, %p150
      %p152 = scmp.ne.s32.totalorder %s141, %s142
      %p153 = scmp.eq.s32.totalorder %s23, 0
      %p154 = por %p152, %p153
      %p155 = scmp.ne.s32.totalorder %s141, %s142
      %p156 = scmp.eq.s32.totalorder %s24, 1
      %p157 = por %p155, %p156
      %p159 = scmp.ne.s32.totalorder %s142, %s158
      %p160 = scmp.eq.s32.totalorder %s24, 0
      %p161 = por %p159, %p160
      %p162 = scmp.le.s32.totalorder 1, %s18
      %p163 = scmp.lt.s32.totalorder %s18, 3
      %p164 = pnand %p162, %p163
      %p165 = pneg %p164
      // Predicated region
      $region9: #{tpu_custom_call.1} parent=5 // pred_check
        _
      $region10: #{tpu_custom_call.1} parent=5 // pred_check_branch
        %167 = sbr.rel (%p164) target = $region12
      $region11: #{tpu_custom_call.1} parent=5 // pred_region
        %s168 = ssub.s32 %s18, 1
        // Predicated region
        $region13: #{tpu_custom_call.1} parent=11 // pred_check
          %p169 = pneg %p65
        $region14: #{tpu_custom_call.1} parent=11 // pred_check_branch
          %171 = sbr.rel (%p169) target = $region16
        $region15: #{tpu_custom_call.1} parent=11 // pred_region
          %s173 = ssub.s32 512, 512
          %174 = vsyncadd [#allocation8], %s173
          %s175 = sshll.u32 [#allocation7], 4
          %s176 = int_to_ptr.vmem [resolvable:$true] %s175
          %181 = dma.hbm_to_vmem [thread:$0]  %s1, 512, %s176, [#allocation8], 128, 128, 8
        $region16: #{tpu_custom_call.1} parent=11 // pred_fallthru
          _
        // Predicated region
        $region17: #{tpu_custom_call.1} parent=11 // pred_check
          %p182 = pneg %p86
        $region18: #{tpu_custom_call.1} parent=11 // pred_check_branch
          %184 = sbr.rel (%p182) target = $region20
        $region19: #{tpu_custom_call.1} parent=11 // pred_region
          _
        $region20: #{tpu_custom_call.1} parent=11 // pred_fallthru
          _
        // Predicated region
        $region21: #{tpu_custom_call.1} parent=11 // pred_check
          %p185 = pneg %p107
        $region22: #{tpu_custom_call.1} parent=11 // pred_check_branch
          %187 = sbr.rel (%p185) target = $region24
        $region23: #{tpu_custom_call.1} parent=11 // pred_region
          %s189 = ssub.s32 512, 512
          %190 = vsyncadd [#allocation8], %s189
          %s191 = sshll.u32 [#allocation9], 4
          %s192 = int_to_ptr.vmem [resolvable:$true] %s191
          %197 = dma.hbm_to_vmem [thread:$0]  %s3, 512, %s192, [#allocation8], 128, 128, 8
        $region24: #{tpu_custom_call.1} parent=11 // pred_fallthru
          _
        // Predicated region
        $region25: #{tpu_custom_call.1} parent=11 // pred_check
          %p198 = pneg %p128
        $region26: #{tpu_custom_call.1} parent=11 // pred_check_branch
          %200 = sbr.rel (%p198) target = $region28
        $region27: #{tpu_custom_call.1} parent=11 // pred_region
          _
        $region28: #{tpu_custom_call.1} parent=11 // pred_fallthru
          _
      $region12: #{tpu_custom_call.1} parent=5 // pred_fallthru
        _
      %p201 = scmp.lt.s32.totalorder %s18, 2
      // Predicated region
      $region29: #{tpu_custom_call.1} parent=5 // pred_check
        %p202 = pneg %p201
      $region30: #{tpu_custom_call.1} parent=5 // pred_check_branch
        %204 = sbr.rel (%p202) target = $region32
      $region31: #{tpu_custom_call.1} parent=5 // pred_region
        // Predicated region
        $region33: #{tpu_custom_call.1} parent=31 // pred_check
          %p205 = pneg %p38
        $region34: #{tpu_custom_call.1} parent=31 // pred_check_branch
          %207 = sbr.rel (%p205) target = $region36
        $region35: #{tpu_custom_call.1} parent=31 // pred_region
          %s208 = sand.u32 %s28, 1
          %s209 = scalar_lea.sflag [#allocation5], %s208
          %s210 = sand.u32 %s28, 1
          %s211 = smul.addr %s210, 8
          %s212 = scalar_lea.vmem [#allocation4], %s211
          %s214 = ssub.s32 128, 128
          %215 = vsyncadd %s209, %s214
          %s216 = smul.addr %s18, 128
          %s217 = scalar_lea.hbm %s0, %s216
          %s219 = sshll.u32 %s212, 4
          %s220 = int_to_ptr.vmem [resolvable:$true] %s219
          %222 = dma.hbm_to_vmem [thread:$0]  %s217, 128, %s220, %s209
        $region36: #{tpu_custom_call.1} parent=31 // pred_fallthru
          _
      $region32: #{tpu_custom_call.1} parent=5 // pred_fallthru
        _
      %p223 = scmp.le.s32.totalorder 1, %s18
      %p224 = scmp.lt.s32.totalorder %s18, 3
      %p225 = pnand %p223, %p224
      %p226 = pneg %p225
      // Predicated region
      $region37: #{tpu_custom_call.1} parent=5 // pred_check
        _
      $region38: #{tpu_custom_call.1} parent=5 // pred_check_branch
        %228 = sbr.rel (%p225) target = $region40
      $region39: #{tpu_custom_call.1} parent=5 // pred_region
        %s229 = ssub.s32 %s18, 1
        %s230 = sand.u32 %s31, 1
        %s231 = scalar_lea.sflag [#allocation5], %s230
        %s232 = sand.u32 %s31, 1
        %s233 = smul.addr %s232, 8
        %s234 = scalar_lea.vmem [#allocation4], %s233
        // Predicated region
        $region41: #{tpu_custom_call.1} parent=39 // pred_check
          %p235 = pneg %p44
        $region42: #{tpu_custom_call.1} parent=39 // pred_check_branch
          %237 = sbr.rel (%p235) target = $region44
        $region43: #{tpu_custom_call.1} parent=39 // pred_region
          %238 = dma.done %s231, 128
        $region44: #{tpu_custom_call.1} parent=39 // pred_fallthru
          _
        // Predicated region
        $region45: #{tpu_custom_call.1} parent=39 // pred_check
          %p239 = pneg %p65
        $region46: #{tpu_custom_call.1} parent=39 // pred_check_branch
          %241 = sbr.rel (%p239) target = $region48
        $region47: #{tpu_custom_call.1} parent=39 // pred_region
          %242 = dma.done [#allocation8], 512
        $region48: #{tpu_custom_call.1} parent=39 // pred_fallthru
          _
        // Predicated region
        $region49: #{tpu_custom_call.1} parent=39 // pred_check
          %p243 = pneg %p107
        $region50: #{tpu_custom_call.1} parent=39 // pred_check_branch
          %245 = sbr.rel (%p243) target = $region52
        $region51: #{tpu_custom_call.1} parent=39 // pred_region
          %246 = dma.done [#allocation8], 512
        $region52: #{tpu_custom_call.1} parent=39 // pred_fallthru
          _
        %s247 = sand.u32 %s31, 1
        %s248 = scalar_lea.sflag [#allocation5], %s247
        %s249 = sand.u32 %s31, 1
        %s250 = smul.addr %s249, 8
        %s251 = scalar_lea.vmem [#allocation4], %s250
        %p252 = pneg %p44
        %p253 = pneg %p41
        %p254 = pneg %p65
        %p255 = pneg %p62
        %p256 = pneg %p86
        %p257 = pneg %p83
        %p258 = pneg %p107
        %p259 = pneg %p104
        %p260 = pneg %p128
        %p261 = pneg %p125
        %p262 = pneg %p154
        %p263 = pneg %p151
        %s264 = sand.u32 %s141, 1
        %s265 = scalar_lea.sflag [#allocation6], %s264
        %s266 = sand.u32 %s141, 1
        %s267 = smul.addr %s266, 8
        %s268 = scalar_lea.vmem [#allocation10], %s267
        %v269 = vld [vmem:[%s234] sm:$0xff]
        %v270 = vld [vmem:[#allocation7] sm:$0xff]
        %v271 = vld [vmem:[#allocation7 + $0x8] sm:$0xff]
        %v272 = vld [vmem:[#allocation7 + $0x10] sm:$0xff]
        %v273 = vld [vmem:[#allocation7 + $0x18] sm:$0xff]
        %v274 = vld [vmem:[%s2] sm:$0x1]
        %v276 = vlaneseq
        %v277 = vshrl.u32 %v276, 7
        %v278 = vsub.s32 0, %v277
        %v279 = vrot.slane %v274, %v278
        %vm281 = vcmask 261120
        %v283 = vsel %vm281, %v269, 0
        %285 = vmatprep.subr.mxu0 0.0
        %286 = vmatpush1.msra.mxu0 %v270
        %287 = vmatprep.subr.mxu0 0.0
        %288 = vmatpush1.msra.mxu0 %v271
        %289 = vmatprep.subr.mxu0 0.0
        %290 = vmatpush1.msra.mxu0 %v272
        %291 = vmatprep.subr.mxu0 0.0
        %292 = vmatpush1.msra.mxu0 %v273
        %293 = vmatprep.subr.mxu0 0.0
        %294 = vmatpush1.msra.mxu0 0.0
        %295 = vmatprep.subr.mxu0 0.0
        %296 = vmatpush1.msra.mxu0 0.0
        %297 = vmatprep.subr.mxu0 0.0
        %298 = vmatpush1.msra.mxu0 0.0
        %299 = vmatprep.subr.mxu0 0.0
        %300 = vmatpush1.msra.mxu0 0.0
        %301 = vmatprep.subr.mxu0 0.0
        %302 = vmatpush1.msra.mxu0 0.0
        %303 = vmatprep.subr.mxu0 0.0
        %304 = vmatpush1.msra.mxu0 0.0
        %305 = vmatprep.subr.mxu0 0.0
        %306 = vmatpush1.msra.mxu0 0.0
        %307 = vmatprep.subr.mxu0 0.0
        %308 = vmatpush1.msra.mxu0 0.0
        %309 = vmatprep.subr.mxu0 0.0
        %310 = vmatpush1.msra.mxu0 0.0
        %311 = vmatprep.subr.mxu0 0.0
        %312 = vmatpush1.msra.mxu0 0.0
        %313 = vmatprep.subr.mxu0 0.0
        %314 = vmatpush1.msra.mxu0 0.0
        %315 = vmatprep.subr.mxu0 0.0
        %316 = vmatpush1.msra.mxu0 0.0
        %317 = vmatprep.subr.mxu0 0.0
        %318 = vmatpush1.msra.mxu0 0.0
        %319 = vmatprep.subr.mxu0 0.0
        %320 = vmatpush1.msra.mxu0 0.0
        %321 = vmatprep.subr.mxu0 0.0
        %322 = vmatpush1.msra.mxu0 0.0
        %323 = vmatprep.subr.mxu0 0.0
        %324 = vmatpush1.msra.mxu0 0.0
        %325 = vmatprep.subr.mxu0 0.0
        %326 = vmatpush1.msra.mxu0 0.0
        %327 = vmatprep.subr.mxu0 0.0
        %328 = vmatpush1.msra.mxu0 0.0
        %329 = vmatprep.subr.mxu0 0.0
        %330 = vmatpush1.msra.mxu0 0.0
        %331 = vmatprep.subr.mxu0 0.0
        %332 = vmatpush1.msra.mxu0 0.0
        %333 = vmatprep.subr.mxu0 0.0
        %334 = vmatpush1.msra.mxu0 0.0
        %335 = vmatprep.subr.mxu0 0.0
        %336 = vmatpush1.msra.mxu0 0.0
        %337 = vmatprep.subr.mxu0 0.0
        %338 = vmatpush1.msra.mxu0 0.0
        %339 = vmatprep.subr.mxu0 0.0
        %340 = vmatpush1.msra.mxu0 0.0
        %341 = vmatprep.subr.mxu0 0.0
        %342 = vmatpush1.msra.mxu0 0.0
        %343 = vmatprep.subr.mxu0 0.0
        %344 = vmatpush1.msra.mxu0 0.0
        %345 = vmatprep.subr.mxu0 0.0
        %346 = vmatpush1.msra.mxu0 0.0
        %347 = vmatprep.subr.mxu0 0.0
        %348 = vmatpush1.msra.mxu0 0.0
        %349 = vmatprep.mubr.f32.mxu0 0.0
        %350 = vmatmul.mubr.f32.gmra.mrb[0].mxu0 %v283
        %v351 = vpop.f32.mrb[0].mxu0
        %v352 = vadd.f32 %v279, %v351
        %v353 = vpop.f32.mrb[0].mxu0
        %354 = vdwg.mxu0
        %vm355 = vcmask 785408
        %356 = vst.msk [vmem:[#allocation2] sm:$0xff] %vm355, %v352
        %v357 = vld [vmem:[#allocation2] sm:$0xff]
        %359 = vrot.lane.b32.xlu0 %v357, 96
        %v360 = vpop.permute.xlu0 %359
        %vm361 = vcmask 64512
        %v362 = vsel %vm361, %v357, 0
        %v364 = vsel %vm361, %v360, 0
        %366 = vmatprep.subr.mxu0 0.0
        %367 = vmatpush1.xpose.msra.mxu0 %v364
        %368 = vmatprep.subr.mxu0 0.0
        %369 = vmatpush1.xpose.msra.mxu0 0.0
        %370 = vmatprep.subr.mxu0 0.0
        %371 = vmatpush1.xpose.msra.mxu0 0.0
        %372 = vmatprep.subr.mxu0 0.0
        %373 = vmatpush1.xpose.msra.mxu0 0.0
        %374 = vmatprep.subr.mxu0 0.0
        %375 = vmatpush1.xpose.msra.mxu0 0.0
        %376 = vmatprep.subr.mxu0 0.0
        %377 = vmatpush1.xpose.msra.mxu0 0.0
        %378 = vmatprep.subr.mxu0 0.0
        %379 = vmatpush1.xpose.msra.mxu0 0.0
        %380 = vmatprep.subr.mxu0 0.0
        %381 = vmatpush1.xpose.msra.mxu0 0.0
        %382 = vmatprep.subr.mxu0 0.0
        %383 = vmatpush1.xpose.msra.mxu0 0.0
        %384 = vmatprep.subr.mxu0 0.0
        %385 = vmatpush1.xpose.msra.mxu0 0.0
        %386 = vmatprep.subr.mxu0 0.0
        %387 = vmatpush1.xpose.msra.mxu0 0.0
        %388 = vmatprep.subr.mxu0 0.0
        %389 = vmatpush1.xpose.msra.mxu0 0.0
        %390 = vmatprep.subr.mxu0 0.0
        %391 = vmatpush1.xpose.msra.mxu0 0.0
        %392 = vmatprep.subr.mxu0 0.0
        %393 = vmatpush1.xpose.msra.mxu0 0.0
        %394 = vmatprep.subr.mxu0 0.0
        %395 = vmatpush1.xpose.msra.mxu0 0.0
        %396 = vmatprep.subr.mxu0 0.0
        %397 = vmatpush1.xpose.msra.mxu0 0.0
        %398 = vmatprep.subr.mxu0 0.0
        %399 = vmatpush1.xpose.msra.mxu0 0.0
        %400 = vmatprep.subr.mxu0 0.0
        %401 = vmatpush1.xpose.msra.mxu0 0.0
        %402 = vmatprep.subr.mxu0 0.0
        %403 = vmatpush1.xpose.msra.mxu0 0.0
        %404 = vmatprep.subr.mxu0 0.0
        %405 = vmatpush1.xpose.msra.mxu0 0.0
        %406 = vmatprep.subr.mxu0 0.0
        %407 = vmatpush1.xpose.msra.mxu0 0.0
        %408 = vmatprep.subr.mxu0 0.0
        %409 = vmatpush1.xpose.msra.mxu0 0.0
        %410 = vmatprep.subr.mxu0 0.0
        %411 = vmatpush1.xpose.msra.mxu0 0.0
        %412 = vmatprep.subr.mxu0 0.0
        %413 = vmatpush1.xpose.msra.mxu0 0.0
        %414 = vmatprep.subr.mxu0 0.0
        %415 = vmatpush1.xpose.msra.mxu0 0.0
        %416 = vmatprep.subr.mxu0 0.0
        %417 = vmatpush1.xpose.msra.mxu0 0.0
        %418 = vmatprep.subr.mxu0 0.0
        %419 = vmatpush1.xpose.msra.mxu0 0.0
        %420 = vmatprep.subr.mxu0 0.0
        %421 = vmatpush1.xpose.msra.mxu0 0.0
        %422 = vmatprep.subr.mxu0 0.0
        %423 = vmatpush1.xpose.msra.mxu0 0.0
        %424 = vmatprep.subr.mxu0 0.0
        %425 = vmatpush1.xpose.msra.mxu0 0.0
        %426 = vmatprep.subr.mxu0 0.0
        %427 = vmatpush1.xpose.msra.mxu0 0.0
        %428 = vmatprep.subr.mxu0 0.0
        %429 = vmatpush1.xpose.msra.mxu0 0.0
        %430 = vmatprep.mubr.f32.mxu0 0.0
        %431 = vmatmul.mubr.f32.gmra.mrb[0].mxu0 %v362
        %v432 = vpop.f32.mrb[0].mxu0
        %v433 = vadd.f32 0.0, %v432
        %v434 = vpop.f32.mrb[0].mxu0
        %435 = vdwg.mxu0
        %v436 = vsel %vm361, %v433, -inf
        %437 = vmax.xlane.f32.xlu0 %v436
        %v438 = vpop.xlane.xlu0 %437
        %v439 = vsub.f32 %v433, %v438
        %v440 = vmul.f32 %v439, 1.442695
        %v441 = vpow.pop %v440
        %v442 = vsel %vm361, %v441, 0.0
        %443 = vadd.xlane.f32.xlu0 %v442
        %v444 = vpop.xlane.xlu0 %443
        %445 = vrot.lane.b32.xlu0 %v357, 64
        %v446 = vpop.permute.xlu0 %445
        %v449 = vsel %vm361, %v441, 0
        %451 = vmatprep.subr.mxu0 0.0
        %452 = vmatpush1.msra.mxu0 %v446
        %453 = vmatprep.subr.mxu0 0.0
        %454 = vmatpush1.msra.mxu0 0.0
        %455 = vmatprep.subr.mxu0 0.0
        %456 = vmatpush1.msra.mxu0 0.0
        %457 = vmatprep.subr.mxu0 0.0
        %458 = vmatpush1.msra.mxu0 0.0
        %459 = vmatprep.subr.mxu0 0.0
        %460 = vmatpush1.msra.mxu0 0.0
        %461 = vmatprep.subr.mxu0 0.0
        %462 = vmatpush1.msra.mxu0 0.0
        %463 = vmatprep.subr.mxu0 0.0
        %464 = vmatpush1.msra.mxu0 0.0
        %465 = vmatprep.subr.mxu0 0.0
        %466 = vmatpush1.msra.mxu0 0.0
        %467 = vmatprep.subr.mxu0 0.0
        %468 = vmatpush1.msra.mxu0 0.0
        %469 = vmatprep.subr.mxu0 0.0
        %470 = vmatpush1.msra.mxu0 0.0
        %471 = vmatprep.subr.mxu0 0.0
        %472 = vmatpush1.msra.mxu0 0.0
        %473 = vmatprep.subr.mxu0 0.0
        %474 = vmatpush1.msra.mxu0 0.0
        %475 = vmatprep.subr.mxu0 0.0
        %476 = vmatpush1.msra.mxu0 0.0
        %477 = vmatprep.subr.mxu0 0.0
        %478 = vmatpush1.msra.mxu0 0.0
        %479 = vmatprep.subr.mxu0 0.0
        %480 = vmatpush1.msra.mxu0 0.0
        %481 = vmatprep.subr.mxu0 0.0
        %482 = vmatpush1.msra.mxu0 0.0
        %483 = vmatprep.subr.mxu0 0.0
        %484 = vmatpush1.msra.mxu0 0.0
        %485 = vmatprep.subr.mxu0 0.0
        %486 = vmatpush1.msra.mxu0 0.0
        %487 = vmatprep.subr.mxu0 0.0
        %488 = vmatpush1.msra.mxu0 0.0
        %489 = vmatprep.subr.mxu0 0.0
        %490 = vmatpush1.msra.mxu0 0.0
        %491 = vmatprep.subr.mxu0 0.0
        %492 = vmatpush1.msra.mxu0 0.0
        %493 = vmatprep.subr.mxu0 0.0
        %494 = vmatpush1.msra.mxu0 0.0
        %495 = vmatprep.subr.mxu0 0.0
        %496 = vmatpush1.msra.mxu0 0.0
        %497 = vmatprep.subr.mxu0 0.0
        %498 = vmatpush1.msra.mxu0 0.0
        %499 = vmatprep.subr.mxu0 0.0
        %500 = vmatpush1.msra.mxu0 0.0
        %501 = vmatprep.subr.mxu0 0.0
        %502 = vmatpush1.msra.mxu0 0.0
        %503 = vmatprep.subr.mxu0 0.0
        %504 = vmatpush1.msra.mxu0 0.0
        %505 = vmatprep.subr.mxu0 0.0
        %506 = vmatpush1.msra.mxu0 0.0
        %507 = vmatprep.subr.mxu0 0.0
        %508 = vmatpush1.msra.mxu0 0.0
        %509 = vmatprep.subr.mxu0 0.0
        %510 = vmatpush1.msra.mxu0 0.0
        %511 = vmatprep.subr.mxu0 0.0
        %512 = vmatpush1.msra.mxu0 0.0
        %513 = vmatprep.subr.mxu0 0.0
        %514 = vmatpush1.msra.mxu0 0.0
        %515 = vmatprep.mubr.f32.mxu0 0.0
        %516 = vmatmul.mubr.f32.gmra.mrb[0].mxu0 %v449
        %v517 = vpop.f32.mrb[0].mxu0
        %v518 = vadd.f32 0.0, %v517
        %v519 = vpop.f32.mrb[0].mxu0
        %520 = vdwg.mxu0
        %v521 = vrcp.pop %v444
        %v522 = vmul.f32 %v518, %v521
        %523 = vst.msk [vmem:[#allocation3] sm:$0xff] %vm361, %v522
        %v524 = vld [vmem:[#allocation2] sm:$0xff]
        %526 = vrot.lane.b32.xlu0 %v524, 120
        %v527 = vpop.permute.xlu0 %526
        %528 = vrot.lane.b32.xlu0 %v524, 88
        %v529 = vpop.permute.xlu0 %528
        %v530 = vsel %vm361, %v527, 0
        %v532 = vsel %vm361, %v529, 0
        %534 = vmatprep.subr.mxu0 0.0
        %535 = vmatpush1.xpose.msra.mxu0 %v532
        %536 = vmatprep.subr.mxu0 0.0
        %537 = vmatpush1.xpose.msra.mxu0 0.0
        %538 = vmatprep.subr.mxu0 0.0
        %539 = vmatpush1.xpose.msra.mxu0 0.0
        %540 = vmatprep.subr.mxu0 0.0
        %541 = vmatpush1.xpose.msra.mxu0 0.0
        %542 = vmatprep.subr.mxu0 0.0
        %543 = vmatpush1.xpose.msra.mxu0 0.0
        %544 = vmatprep.subr.mxu0 0.0
        %545 = vmatpush1.xpose.msra.mxu0 0.0
        %546 = vmatprep.subr.mxu0 0.0
        %547 = vmatpush1.xpose.msra.mxu0 0.0
        %548 = vmatprep.subr.mxu0 0.0
        %549 = vmatpush1.xpose.msra.mxu0 0.0
        %550 = vmatprep.subr.mxu0 0.0
        %551 = vmatpush1.xpose.msra.mxu0 0.0
        %552 = vmatprep.subr.mxu0 0.0
        %553 = vmatpush1.xpose.msra.mxu0 0.0
        %554 = vmatprep.subr.mxu0 0.0
        %555 = vmatpush1.xpose.msra.mxu0 0.0
        %556 = vmatprep.subr.mxu0 0.0
        %557 = vmatpush1.xpose.msra.mxu0 0.0
        %558 = vmatprep.subr.mxu0 0.0
        %559 = vmatpush1.xpose.msra.mxu0 0.0
        %560 = vmatprep.subr.mxu0 0.0
        %561 = vmatpush1.xpose.msra.mxu0 0.0
        %562 = vmatprep.subr.mxu0 0.0
        %563 = vmatpush1.xpose.msra.mxu0 0.0
        %564 = vmatprep.subr.mxu0 0.0
        %565 = vmatpush1.xpose.msra.mxu0 0.0
        %566 = vmatprep.subr.mxu0 0.0
        %567 = vmatpush1.xpose.msra.mxu0 0.0
        %568 = vmatprep.subr.mxu0 0.0
        %569 = vmatpush1.xpose.msra.mxu0 0.0
        %570 = vmatprep.subr.mxu0 0.0
        %571 = vmatpush1.xpose.msra.mxu0 0.0
        %572 = vmatprep.subr.mxu0 0.0
        %573 = vmatpush1.xpose.msra.mxu0 0.0
        %574 = vmatprep.subr.mxu0 0.0
        %575 = vmatpush1.xpose.msra.mxu0 0.0
        %576 = vmatprep.subr.mxu0 0.0
        %577 = vmatpush1.xpose.msra.mxu0 0.0
        %578 = vmatprep.subr.mxu0 0.0
        %579 = vmatpush1.xpose.msra.mxu0 0.0
        %580 = vmatprep.subr.mxu0 0.0
        %581 = vmatpush1.xpose.msra.mxu0 0.0
        %582 = vmatprep.subr.mxu0 0.0
        %583 = vmatpush1.xpose.msra.mxu0 0.0
        %584 = vmatprep.subr.mxu0 0.0
        %585 = vmatpush1.xpose.msra.mxu0 0.0
        %586 = vmatprep.subr.mxu0 0.0
        %587 = vmatpush1.xpose.msra.mxu0 0.0
        %588 = vmatprep.subr.mxu0 0.0
        %589 = vmatpush1.xpose.msra.mxu0 0.0
        %590 = vmatprep.subr.mxu0 0.0
        %591 = vmatpush1.xpose.msra.mxu0 0.0
        %592 = vmatprep.subr.mxu0 0.0
        %593 = vmatpush1.xpose.msra.mxu0 0.0
        %594 = vmatprep.subr.mxu0 0.0
        %595 = vmatpush1.xpose.msra.mxu0 0.0
        %596 = vmatprep.subr.mxu0 0.0
        %597 = vmatpush1.xpose.msra.mxu0 0.0
        %598 = vmatprep.mubr.f32.mxu0 0.0
        %599 = vmatmul.mubr.f32.gmra.mrb[0].mxu0 %v530
        %v600 = vpop.f32.mrb[0].mxu0
        %v601 = vadd.f32 0.0, %v600
        %v602 = vpop.f32.mrb[0].mxu0
        %603 = vdwg.mxu0
        %v604 = vsel %vm361, %v601, -inf
        %605 = vmax.xlane.f32.xlu0 %v604
        %v606 = vpop.xlane.xlu0 %605
        %v607 = vsub.f32 %v601, %v606
        %v608 = vmul.f32 %v607, 1.442695
        %v609 = vpow.pop %v608
        %v610 = vsel %vm361, %v609, 0.0
        %611 = vadd.xlane.f32.xlu0 %v610
        %v612 = vpop.xlane.xlu0 %611
        %613 = vrot.lane.b32.xlu0 %v524, 56
        %v614 = vpop.permute.xlu0 %613
        %v617 = vsel %vm361, %v609, 0
        %619 = vmatprep.subr.mxu0 0.0
        %620 = vmatpush1.msra.mxu0 %v614
        %621 = vmatprep.subr.mxu0 0.0
        %622 = vmatpush1.msra.mxu0 0.0
        %623 = vmatprep.subr.mxu0 0.0
        %624 = vmatpush1.msra.mxu0 0.0
        %625 = vmatprep.subr.mxu0 0.0
        %626 = vmatpush1.msra.mxu0 0.0
        %627 = vmatprep.subr.mxu0 0.0
        %628 = vmatpush1.msra.mxu0 0.0
        %629 = vmatprep.subr.mxu0 0.0
        %630 = vmatpush1.msra.mxu0 0.0
        %631 = vmatprep.subr.mxu0 0.0
        %632 = vmatpush1.msra.mxu0 0.0
        %633 = vmatprep.subr.mxu0 0.0
        %634 = vmatpush1.msra.mxu0 0.0
        %635 = vmatprep.subr.mxu0 0.0
        %636 = vmatpush1.msra.mxu0 0.0
        %637 = vmatprep.subr.mxu0 0.0
        %638 = vmatpush1.msra.mxu0 0.0
        %639 = vmatprep.subr.mxu0 0.0
        %640 = vmatpush1.msra.mxu0 0.0
        %641 = vmatprep.subr.mxu0 0.0
        %642 = vmatpush1.msra.mxu0 0.0
        %643 = vmatprep.subr.mxu0 0.0
        %644 = vmatpush1.msra.mxu0 0.0
        %645 = vmatprep.subr.mxu0 0.0
        %646 = vmatpush1.msra.mxu0 0.0
        %647 = vmatprep.subr.mxu0 0.0
        %648 = vmatpush1.msra.mxu0 0.0
        %649 = vmatprep.subr.mxu0 0.0
        %650 = vmatpush1.msra.mxu0 0.0
        %651 = vmatprep.subr.mxu0 0.0
        %652 = vmatpush1.msra.mxu0 0.0
        %653 = vmatprep.subr.mxu0 0.0
        %654 = vmatpush1.msra.mxu0 0.0
        %655 = vmatprep.subr.mxu0 0.0
        %656 = vmatpush1.msra.mxu0 0.0
        %657 = vmatprep.subr.mxu0 0.0
        %658 = vmatpush1.msra.mxu0 0.0
        %659 = vmatprep.subr.mxu0 0.0
        %660 = vmatpush1.msra.mxu0 0.0
        %661 = vmatprep.subr.mxu0 0.0
        %662 = vmatpush1.msra.mxu0 0.0
        %663 = vmatprep.subr.mxu0 0.0
        %664 = vmatpush1.msra.mxu0 0.0
        %665 = vmatprep.subr.mxu0 0.0
        %666 = vmatpush1.msra.mxu0 0.0
        %667 = vmatprep.subr.mxu0 0.0
        %668 = vmatpush1.msra.mxu0 0.0
        %669 = vmatprep.subr.mxu0 0.0
        %670 = vmatpush1.msra.mxu0 0.0
        %671 = vmatprep.subr.mxu0 0.0
        %672 = vmatpush1.msra.mxu0 0.0
        %673 = vmatprep.subr.mxu0 0.0
        %674 = vmatpush1.msra.mxu0 0.0
        %675 = vmatprep.subr.mxu0 0.0
        %676 = vmatpush1.msra.mxu0 0.0
        %677 = vmatprep.subr.mxu0 0.0
        %678 = vmatpush1.msra.mxu0 0.0
        %679 = vmatprep.subr.mxu0 0.0
        %680 = vmatpush1.msra.mxu0 0.0
        %681 = vmatprep.subr.mxu0 0.0
        %682 = vmatpush1.msra.mxu0 0.0
        %683 = vmatprep.mubr.f32.mxu0 0.0
        %684 = vmatmul.mubr.f32.gmra.mrb[0].mxu0 %v617
        %v685 = vpop.f32.mrb[0].mxu0
        %v686 = vadd.f32 0.0, %v685
        %v687 = vpop.f32.mrb[0].mxu0
        %688 = vdwg.mxu0
        %v689 = vrcp.pop %v612
        %v690 = vmul.f32 %v686, %v689
        %692 = vrot.lane.b32.xlu0 %v690, 8
        %v693 = vpop.permute.xlu0 %692
        %vm695 = vcmask 130112
        %696 = vst.msk [vmem:[#allocation3] sm:$0xff] %vm695, %v693
        %v697 = vld [vmem:[#allocation2] sm:$0xff]
        %699 = vrot.lane.b32.xlu0 %v697, 112
        %v700 = vpop.permute.xlu0 %699
        %701 = vrot.lane.b32.xlu0 %v697, 80
        %v702 = vpop.permute.xlu0 %701
        %v703 = vsel %vm361, %v700, 0
        %v705 = vsel %vm361, %v702, 0
        %707 = vmatprep.subr.mxu0 0.0
        %708 = vmatpush1.xpose.msra.mxu0 %v705
        %709 = vmatprep.subr.mxu0 0.0
        %710 = vmatpush1.xpose.msra.mxu0 0.0
        %711 = vmatprep.subr.mxu0 0.0
        %712 = vmatpush1.xpose.msra.mxu0 0.0
        %713 = vmatprep.subr.mxu0 0.0
        %714 = vmatpush1.xpose.msra.mxu0 0.0
        %715 = vmatprep.subr.mxu0 0.0
        %716 = vmatpush1.xpose.msra.mxu0 0.0
        %717 = vmatprep.subr.mxu0 0.0
        %718 = vmatpush1.xpose.msra.mxu0 0.0
        %719 = vmatprep.subr.mxu0 0.0
        %720 = vmatpush1.xpose.msra.mxu0 0.0
        %721 = vmatprep.subr.mxu0 0.0
        %722 = vmatpush1.xpose.msra.mxu0 0.0
        %723 = vmatprep.subr.mxu0 0.0
        %724 = vmatpush1.xpose.msra.mxu0 0.0
        %725 = vmatprep.subr.mxu0 0.0
        %726 = vmatpush1.xpose.msra.mxu0 0.0
        %727 = vmatprep.subr.mxu0 0.0
        %728 = vmatpush1.xpose.msra.mxu0 0.0
        %729 = vmatprep.subr.mxu0 0.0
        %730 = vmatpush1.xpose.msra.mxu0 0.0
        %731 = vmatprep.subr.mxu0 0.0
        %732 = vmatpush1.xpose.msra.mxu0 0.0
        %733 = vmatprep.subr.mxu0 0.0
        %734 = vmatpush1.xpose.msra.mxu0 0.0
        %735 = vmatprep.subr.mxu0 0.0
        %736 = vmatpush1.xpose.msra.mxu0 0.0
        %737 = vmatprep.subr.mxu0 0.0
        %738 = vmatpush1.xpose.msra.mxu0 0.0
        %739 = vmatprep.subr.mxu0 0.0
        %740 = vmatpush1.xpose.msra.mxu0 0.0
        %741 = vmatprep.subr.mxu0 0.0
        %742 = vmatpush1.xpose.msra.mxu0 0.0
        %743 = vmatprep.subr.mxu0 0.0
        %744 = vmatpush1.xpose.msra.mxu0 0.0
        %745 = vmatprep.subr.mxu0 0.0
        %746 = vmatpush1.xpose.msra.mxu0 0.0
        %747 = vmatprep.subr.mxu0 0.0
        %748 = vmatpush1.xpose.msra.mxu0 0.0
        %749 = vmatprep.subr.mxu0 0.0
        %750 = vmatpush1.xpose.msra.mxu0 0.0
        %751 = vmatprep.subr.mxu0 0.0
        %752 = vmatpush1.xpose.msra.mxu0 0.0
        %753 = vmatprep.subr.mxu0 0.0
        %754 = vmatpush1.xpose.msra.mxu0 0.0
        %755 = vmatprep.subr.mxu0 0.0
        %756 = vmatpush1.xpose.msra.mxu0 0.0
        %757 = vmatprep.subr.mxu0 0.0
        %758 = vmatpush1.xpose.msra.mxu0 0.0
        %759 = vmatprep.subr.mxu0 0.0
        %760 = vmatpush1.xpose.msra.mxu0 0.0
        %761 = vmatprep.subr.mxu0 0.0
        %762 = vmatpush1.xpose.msra.mxu0 0.0
        %763 = vmatprep.subr.mxu0 0.0
        %764 = vmatpush1.xpose.msra.mxu0 0.0
        %765 = vmatprep.subr.mxu0 0.0
        %766 = vmatpush1.xpose.msra.mxu0 0.0
        %767 = vmatprep.subr.mxu0 0.0
        %768 = vmatpush1.xpose.msra.mxu0 0.0
        %769 = vmatprep.subr.mxu0 0.0
        %770 = vmatpush1.xpose.msra.mxu0 0.0
        %771 = vmatprep.mubr.f32.mxu0 0.0
        %772 = vmatmul.mubr.f32.gmra.mrb[0].mxu0 %v703
        %v773 = vpop.f32.mrb[0].mxu0
        %v774 = vadd.f32 0.0, %v773
        %v775 = vpop.f32.mrb[0].mxu0
        %776 = vdwg.mxu0
        %v777 = vsel %vm361, %v774, -inf
        %778 = vmax.xlane.f32.xlu0 %v777
        %v779 = vpop.xlane.xlu0 %778
        %v780 = vsub.f32 %v774, %v779
        %v781 = vmul.f32 %v780, 1.442695
        %v782 = vpow.pop %v781
        %v783 = vsel %vm361, %v782, 0.0
        %784 = vadd.xlane.f32.xlu0 %v783
        %v785 = vpop.xlane.xlu0 %784
        %786 = vrot.lane.b32.xlu0 %v697, 48
        %v787 = vpop.permute.xlu0 %786
        %v790 = vsel %vm361, %v782, 0
        %792 = vmatprep.subr.mxu0 0.0
        %793 = vmatpush1.msra.mxu0 %v787
        %794 = vmatprep.subr.mxu0 0.0
        %795 = vmatpush1.msra.mxu0 0.0
        %796 = vmatprep.subr.mxu0 0.0
        %797 = vmatpush1.msra.mxu0 0.0
        %798 = vmatprep.subr.mxu0 0.0
        %799 = vmatpush1.msra.mxu0 0.0
        %800 = vmatprep.subr.mxu0 0.0
        %801 = vmatpush1.msra.mxu0 0.0
        %802 = vmatprep.subr.mxu0 0.0
        %803 = vmatpush1.msra.mxu0 0.0
        %804 = vmatprep.subr.mxu0 0.0
        %805 = vmatpush1.msra.mxu0 0.0
        %806 = vmatprep.subr.mxu0 0.0
        %807 = vmatpush1.msra.mxu0 0.0
        %808 = vmatprep.subr.mxu0 0.0
        %809 = vmatpush1.msra.mxu0 0.0
        %810 = vmatprep.subr.mxu0 0.0
        %811 = vmatpush1.msra.mxu0 0.0
        %812 = vmatprep.subr.mxu0 0.0
        %813 = vmatpush1.msra.mxu0 0.0
        %814 = vmatprep.subr.mxu0 0.0
        %815 = vmatpush1.msra.mxu0 0.0
        %816 = vmatprep.subr.mxu0 0.0
        %817 = vmatpush1.msra.mxu0 0.0
        %818 = vmatprep.subr.mxu0 0.0
        %819 = vmatpush1.msra.mxu0 0.0
        %820 = vmatprep.subr.mxu0 0.0
        %821 = vmatpush1.msra.mxu0 0.0
        %822 = vmatprep.subr.mxu0 0.0
        %823 = vmatpush1.msra.mxu0 0.0
        %824 = vmatprep.subr.mxu0 0.0
        %825 = vmatpush1.msra.mxu0 0.0
        %826 = vmatprep.subr.mxu0 0.0
        %827 = vmatpush1.msra.mxu0 0.0
        %828 = vmatprep.subr.mxu0 0.0
        %829 = vmatpush1.msra.mxu0 0.0
        %830 = vmatprep.subr.mxu0 0.0
        %831 = vmatpush1.msra.mxu0 0.0
        %832 = vmatprep.subr.mxu0 0.0
        %833 = vmatpush1.msra.mxu0 0.0
        %834 = vmatprep.subr.mxu0 0.0
        %835 = vmatpush1.msra.mxu0 0.0
        %836 = vmatprep.subr.mxu0 0.0
        %837 = vmatpush1.msra.mxu0 0.0
        %838 = vmatprep.subr.mxu0 0.0
        %839 = vmatpush1.msra.mxu0 0.0
        %840 = vmatprep.subr.mxu0 0.0
        %841 = vmatpush1.msra.mxu0 0.0
        %842 = vmatprep.subr.mxu0 0.0
        %843 = vmatpush1.msra.mxu0 0.0
        %844 = vmatprep.subr.mxu0 0.0
        %845 = vmatpush1.msra.mxu0 0.0
        %846 = vmatprep.subr.mxu0 0.0
        %847 = vmatpush1.msra.mxu0 0.0
        %848 = vmatprep.subr.mxu0 0.0
        %849 = vmatpush1.msra.mxu0 0.0
        %850 = vmatprep.subr.mxu0 0.0
        %851 = vmatpush1.msra.mxu0 0.0
        %852 = vmatprep.subr.mxu0 0.0
        %853 = vmatpush1.msra.mxu0 0.0
        %854 = vmatprep.subr.mxu0 0.0
        %855 = vmatpush1.msra.mxu0 0.0
        %856 = vmatprep.mubr.f32.mxu0 0.0
        %857 = vmatmul.mubr.f32.gmra.mrb[0].mxu0 %v790
        %v858 = vpop.f32.mrb[0].mxu0
        %v859 = vadd.f32 0.0, %v858
        %v860 = vpop.f32.mrb[0].mxu0
        %861 = vdwg.mxu0
        %v862 = vrcp.pop %v785
        %v863 = vmul.f32 %v859, %v862
        %865 = vrot.lane.b32.xlu0 %v863, 16
        %v866 = vpop.permute.xlu0 %865
        %vm868 = vcmask 195712
        %869 = vst.msk [vmem:[#allocation3] sm:$0xff] %vm868, %v866
        %v870 = vld [vmem:[#allocation2] sm:$0xff]
        %872 = vrot.lane.b32.xlu0 %v870, 104
        %v873 = vpop.permute.xlu0 %872
        %874 = vrot.lane.b32.xlu0 %v870, 72
        %v875 = vpop.permute.xlu0 %874
        %v876 = vsel %vm361, %v873, 0
        %v878 = vsel %vm361, %v875, 0
        %880 = vmatprep.subr.mxu0 0.0
        %881 = vmatpush1.xpose.msra.mxu0 %v878
        %882 = vmatprep.subr.mxu0 0.0
        %883 = vmatpush1.xpose.msra.mxu0 0.0
        %884 = vmatprep.subr.mxu0 0.0
        %885 = vmatpush1.xpose.msra.mxu0 0.0
        %886 = vmatprep.subr.mxu0 0.0
        %887 = vmatpush1.xpose.msra.mxu0 0.0
        %888 = vmatprep.subr.mxu0 0.0
        %889 = vmatpush1.xpose.msra.mxu0 0.0
        %890 = vmatprep.subr.mxu0 0.0
        %891 = vmatpush1.xpose.msra.mxu0 0.0
        %892 = vmatprep.subr.mxu0 0.0
        %893 = vmatpush1.xpose.msra.mxu0 0.0
        %894 = vmatprep.subr.mxu0 0.0
        %895 = vmatpush1.xpose.msra.mxu0 0.0
        %896 = vmatprep.subr.mxu0 0.0
        %897 = vmatpush1.xpose.msra.mxu0 0.0
        %898 = vmatprep.subr.mxu0 0.0
        %899 = vmatpush1.xpose.msra.mxu0 0.0
        %900 = vmatprep.subr.mxu0 0.0
        %901 = vmatpush1.xpose.msra.mxu0 0.0
        %902 = vmatprep.subr.mxu0 0.0
        %903 = vmatpush1.xpose.msra.mxu0 0.0
        %904 = vmatprep.subr.mxu0 0.0
        %905 = vmatpush1.xpose.msra.mxu0 0.0
        %906 = vmatprep.subr.mxu0 0.0
        %907 = vmatpush1.xpose.msra.mxu0 0.0
        %908 = vmatprep.subr.mxu0 0.0
        %909 = vmatpush1.xpose.msra.mxu0 0.0
        %910 = vmatprep.subr.mxu0 0.0
        %911 = vmatpush1.xpose.msra.mxu0 0.0
        %912 = vmatprep.subr.mxu0 0.0
        %913 = vmatpush1.xpose.msra.mxu0 0.0
        %914 = vmatprep.subr.mxu0 0.0
        %915 = vmatpush1.xpose.msra.mxu0 0.0
        %916 = vmatprep.subr.mxu0 0.0
        %917 = vmatpush1.xpose.msra.mxu0 0.0
        %918 = vmatprep.subr.mxu0 0.0
        %919 = vmatpush1.xpose.msra.mxu0 0.0
        %920 = vmatprep.subr.mxu0 0.0
        %921 = vmatpush1.xpose.msra.mxu0 0.0
        %922 = vmatprep.subr.mxu0 0.0
        %923 = vmatpush1.xpose.msra.mxu0 0.0
        %924 = vmatprep.subr.mxu0 0.0
        %925 = vmatpush1.xpose.msra.mxu0 0.0
        %926 = vmatprep.subr.mxu0 0.0
        %927 = vmatpush1.xpose.msra.mxu0 0.0
        %928 = vmatprep.subr.mxu0 0.0
        %929 = vmatpush1.xpose.msra.mxu0 0.0
        %930 = vmatprep.subr.mxu0 0.0
        %931 = vmatpush1.xpose.msra.mxu0 0.0
        %932 = vmatprep.subr.mxu0 0.0
        %933 = vmatpush1.xpose.msra.mxu0 0.0
        %934 = vmatprep.subr.mxu0 0.0
        %935 = vmatpush1.xpose.msra.mxu0 0.0
        %936 = vmatprep.subr.mxu0 0.0
        %937 = vmatpush1.xpose.msra.mxu0 0.0
        %938 = vmatprep.subr.mxu0 0.0
        %939 = vmatpush1.xpose.msra.mxu0 0.0
        %940 = vmatprep.subr.mxu0 0.0
        %941 = vmatpush1.xpose.msra.mxu0 0.0
        %942 = vmatprep.subr.mxu0 0.0
        %943 = vmatpush1.xpose.msra.mxu0 0.0
        %944 = vmatprep.mubr.f32.mxu0 0.0
        %945 = vmatmul.mubr.f32.gmra.mrb[0].mxu0 %v876
        %v946 = vpop.f32.mrb[0].mxu0
        %v947 = vadd.f32 0.0, %v946
        %v948 = vpop.f32.mrb[0].mxu0
        %949 = vdwg.mxu0
        %v950 = vsel %vm361, %v947, -inf
        %951 = vmax.xlane.f32.xlu0 %v950
        %v952 = vpop.xlane.xlu0 %951
        %v953 = vsub.f32 %v947, %v952
        %v954 = vmul.f32 %v953, 1.442695
        %v955 = vpow.pop %v954
        %v956 = vsel %vm361, %v955, 0.0
        %957 = vadd.xlane.f32.xlu0 %v956
        %v958 = vpop.xlane.xlu0 %957
        %959 = vrot.lane.b32.xlu0 %v870, 40
        %v960 = vpop.permute.xlu0 %959
        %v963 = vsel %vm361, %v955, 0
        %965 = vmatprep.subr.mxu0 0.0
        %966 = vmatpush1.msra.mxu0 %v960
        %967 = vmatprep.subr.mxu0 0.0
        %968 = vmatpush1.msra.mxu0 0.0
        %969 = vmatprep.subr.mxu0 0.0
        %970 = vmatpush1.msra.mxu0 0.0
        %971 = vmatprep.subr.mxu0 0.0
        %972 = vmatpush1.msra.mxu0 0.0
        %973 = vmatprep.subr.mxu0 0.0
        %974 = vmatpush1.msra.mxu0 0.0
        %975 = vmatprep.subr.mxu0 0.0
        %976 = vmatpush1.msra.mxu0 0.0
        %977 = vmatprep.subr.mxu0 0.0
        %978 = vmatpush1.msra.mxu0 0.0
        %979 = vmatprep.subr.mxu0 0.0
        %980 = vmatpush1.msra.mxu0 0.0
        %981 = vmatprep.subr.mxu0 0.0
        %982 = vmatpush1.msra.mxu0 0.0
        %983 = vmatprep.subr.mxu0 0.0
        %984 = vmatpush1.msra.mxu0 0.0
        %985 = vmatprep.subr.mxu0 0.0
        %986 = vmatpush1.msra.mxu0 0.0
        %987 = vmatprep.subr.mxu0 0.0
        %988 = vmatpush1.msra.mxu0 0.0
        %989 = vmatprep.subr.mxu0 0.0
        %990 = vmatpush1.msra.mxu0 0.0
        %991 = vmatprep.subr.mxu0 0.0
        %992 = vmatpush1.msra.mxu0 0.0
        %993 = vmatprep.subr.mxu0 0.0
        %994 = vmatpush1.msra.mxu0 0.0
        %995 = vmatprep.subr.mxu0 0.0
        %996 = vmatpush1.msra.mxu0 0.0
        %997 = vmatprep.subr.mxu0 0.0
        %998 = vmatpush1.msra.mxu0 0.0
        %999 = vmatprep.subr.mxu0 0.0
        %1000 = vmatpush1.msra.mxu0 0.0
        %1001 = vmatprep.subr.mxu0 0.0
        %1002 = vmatpush1.msra.mxu0 0.0
        %1003 = vmatprep.subr.mxu0 0.0
        %1004 = vmatpush1.msra.mxu0 0.0
        %1005 = vmatprep.subr.mxu0 0.0
        %1006 = vmatpush1.msra.mxu0 0.0
        %1007 = vmatprep.subr.mxu0 0.0
        %1008 = vmatpush1.msra.mxu0 0.0
        %1009 = vmatprep.subr.mxu0 0.0
        %1010 = vmatpush1.msra.mxu0 0.0
        %1011 = vmatprep.subr.mxu0 0.0
        %1012 = vmatpush1.msra.mxu0 0.0
        %1013 = vmatprep.subr.mxu0 0.0
        %1014 = vmatpush1.msra.mxu0 0.0
        %1015 = vmatprep.subr.mxu0 0.0
        %1016 = vmatpush1.msra.mxu0 0.0
        %1017 = vmatprep.subr.mxu0 0.0
        %1018 = vmatpush1.msra.mxu0 0.0
        %1019 = vmatprep.subr.mxu0 0.0
        %1020 = vmatpush1.msra.mxu0 0.0
        %1021 = vmatprep.subr.mxu0 0.0
        %1022 = vmatpush1.msra.mxu0 0.0
        %1023 = vmatprep.subr.mxu0 0.0
        %1024 = vmatpush1.msra.mxu0 0.0
        %1025 = vmatprep.subr.mxu0 0.0
        %1026 = vmatpush1.msra.mxu0 0.0
        %1027 = vmatprep.subr.mxu0 0.0
        %1028 = vmatpush1.msra.mxu0 0.0
        %1029 = vmatprep.mubr.f32.mxu0 0.0
        %1030 = vmatmul.mubr.f32.gmra.mrb[0].mxu0 %v963
        %v1031 = vpop.f32.mrb[0].mxu0
        %v1032 = vadd.f32 0.0, %v1031
        %v1033 = vpop.f32.mrb[0].mxu0
        %1034 = vdwg.mxu0
        %v1035 = vrcp.pop %v958
        %v1036 = vmul.f32 %v1032, %v1035
        %1038 = vrot.lane.b32.xlu0 %v1036, 24
        %v1039 = vpop.permute.xlu0 %1038
        %vm1041 = vcmask 261312
        %1042 = vst.msk [vmem:[#allocation3] sm:$0xff] %vm1041, %v1039
        %v1043 = vld [vmem:[#allocation3] sm:$0xff]
        %v1044 = vld [vmem:[#allocation9] sm:$0xff]
        %v1045 = vld [vmem:[#allocation9 + $0x8] sm:$0xff]
        %v1046 = vld [vmem:[#allocation9 + $0x10] sm:$0xff]
        %v1047 = vld [vmem:[#allocation9 + $0x18] sm:$0xff]
        %v1048 = vld [vmem:[%s4] sm:$0x1]
        %v1050 = vlaneseq
        %v1051 = vshrl.u32 %v1050, 7
        %v1052 = vsub.s32 0, %v1051
        %v1053 = vrot.slane %v1048, %v1052
        %v1056 = vsel %vm281, %v1043, 0
        %1058 = vmatprep.subr.mxu0 0.0
        %1059 = vmatpush1.msra.mxu0 %v1044
        %1060 = vmatprep.subr.mxu0 0.0
        %1061 = vmatpush1.msra.mxu0 %v1045
        %1062 = vmatprep.subr.mxu0 0.0
        %1063 = vmatpush1.msra.mxu0 %v1046
        %1064 = vmatprep.subr.mxu0 0.0
        %1065 = vmatpush1.msra.mxu0 %v1047
        %1066 = vmatprep.subr.mxu0 0.0
        %1067 = vmatpush1.msra.mxu0 0.0
        %1068 = vmatprep.subr.mxu0 0.0
        %1069 = vmatpush1.msra.mxu0 0.0
        %1070 = vmatprep.subr.mxu0 0.0
        %1071 = vmatpush1.msra.mxu0 0.0
        %1072 = vmatprep.subr.mxu0 0.0
        %1073 = vmatpush1.msra.mxu0 0.0
        %1074 = vmatprep.subr.mxu0 0.0
        %1075 = vmatpush1.msra.mxu0 0.0
        %1076 = vmatprep.subr.mxu0 0.0
        %1077 = vmatpush1.msra.mxu0 0.0
        %1078 = vmatprep.subr.mxu0 0.0
        %1079 = vmatpush1.msra.mxu0 0.0
        %1080 = vmatprep.subr.mxu0 0.0
        %1081 = vmatpush1.msra.mxu0 0.0
        %1082 = vmatprep.subr.mxu0 0.0
        %1083 = vmatpush1.msra.mxu0 0.0
        %1084 = vmatprep.subr.mxu0 0.0
        %1085 = vmatpush1.msra.mxu0 0.0
        %1086 = vmatprep.subr.mxu0 0.0
        %1087 = vmatpush1.msra.mxu0 0.0
        %1088 = vmatprep.subr.mxu0 0.0
        %1089 = vmatpush1.msra.mxu0 0.0
        %1090 = vmatprep.subr.mxu0 0.0
        %1091 = vmatpush1.msra.mxu0 0.0
        %1092 = vmatprep.subr.mxu0 0.0
        %1093 = vmatpush1.msra.mxu0 0.0
        %1094 = vmatprep.subr.mxu0 0.0
        %1095 = vmatpush1.msra.mxu0 0.0
        %1096 = vmatprep.subr.mxu0 0.0
        %1097 = vmatpush1.msra.mxu0 0.0
        %1098 = vmatprep.subr.mxu0 0.0
        %1099 = vmatpush1.msra.mxu0 0.0
        %1100 = vmatprep.subr.mxu0 0.0
        %1101 = vmatpush1.msra.mxu0 0.0
        %1102 = vmatprep.subr.mxu0 0.0
        %1103 = vmatpush1.msra.mxu0 0.0
        %1104 = vmatprep.subr.mxu0 0.0
        %1105 = vmatpush1.msra.mxu0 0.0
        %1106 = vmatprep.subr.mxu0 0.0
        %1107 = vmatpush1.msra.mxu0 0.0
        %1108 = vmatprep.subr.mxu0 0.0
        %1109 = vmatpush1.msra.mxu0 0.0
        %1110 = vmatprep.subr.mxu0 0.0
        %1111 = vmatpush1.msra.mxu0 0.0
        %1112 = vmatprep.subr.mxu0 0.0
        %1113 = vmatpush1.msra.mxu0 0.0
        %1114 = vmatprep.subr.mxu0 0.0
        %1115 = vmatpush1.msra.mxu0 0.0
        %1116 = vmatprep.subr.mxu0 0.0
        %1117 = vmatpush1.msra.mxu0 0.0
        %1118 = vmatprep.subr.mxu0 0.0
        %1119 = vmatpush1.msra.mxu0 0.0
        %1120 = vmatprep.subr.mxu0 0.0
        %1121 = vmatpush1.msra.mxu0 0.0
        %1122 = vmatprep.mubr.f32.mxu0 0.0
        %1123 = vmatmul.mubr.f32.gmra.mrb[0].mxu0 %v1056
        %v1124 = vpop.f32.mrb[0].mxu0
        %v1125 = vadd.f32 %v1053, %v1124
        %v1126 = vpop.f32.mrb[0].mxu0
        %1127 = vdwg.mxu0
        %1128 = vst.msk [vmem:[%s268] sm:$0xff] %vm281, %v1125
        %s1129 = sand.u32 %s141, 1
        %s1130 = scalar_lea.sflag [#allocation6], %s1129
        %s1131 = sand.u32 %s141, 1
        %s1132 = smul.addr %s1131, 8
        %s1133 = scalar_lea.vmem [#allocation10], %s1132
        // Predicated region
        $region53: #{tpu_custom_call.1} parent=39 // pred_check
          %p1134 = pneg %p151
        $region54: #{tpu_custom_call.1} parent=39 // pred_check_branch
          %1136 = sbr.rel (%p1134) target = $region56
        $region55: #{tpu_custom_call.1} parent=39 // pred_region
          %s1138 = ssub.s32 128, 128
          %1139 = vsyncadd %s1130, %s1138
          %s1140 = smul.addr %s23, 128
          %s1141 = scalar_lea.hbm %s5, %s1140
          %s1143 = sshll.u32 %s1133, 4
          %s1144 = int_to_ptr.vmem [resolvable:$true] %s1143
          %1146 = dma.vmem_to_hbm [thread:$0]  %s1144, 128, %s1141, %s1130
        $region56: #{tpu_custom_call.1} parent=39 // pred_fallthru
          _
      $region40: #{tpu_custom_call.1} parent=5 // pred_fallthru
        _
      %p1147 = scmp.le.s32.totalorder 2, %s18
      // Predicated region
      $region57: #{tpu_custom_call.1} parent=5 // pred_check
        %p1148 = pneg %p1147
      $region58: #{tpu_custom_call.1} parent=5 // pred_check_branch
        %1150 = sbr.rel (%p1148) target = $region60
      $region59: #{tpu_custom_call.1} parent=5 // pred_region
        %s1151 = ssub.s32 %s18, 2
        // Predicated region
        $region61: #{tpu_custom_call.1} parent=59 // pred_check
          %p1152 = pneg %p157
        $region62: #{tpu_custom_call.1} parent=59 // pred_check_branch
          %1154 = sbr.rel (%p1152) target = $region64
        $region63: #{tpu_custom_call.1} parent=59 // pred_region
          %s1155 = sand.u32 %s142, 1
          %s1156 = scalar_lea.sflag [#allocation6], %s1155
          %s1157 = sand.u32 %s142, 1
          %s1158 = smul.addr %s1157, 8
          %s1159 = scalar_lea.vmem [#allocation10], %s1158
          %1160 = dma.done %s1156, 128
        $region64: #{tpu_custom_call.1} parent=59 // pred_fallthru
          _
      $region60: #{tpu_custom_call.1} parent=5 // pred_fallthru
        _
    $region6: #{tpu_custom_call.1} parent=1 // loop_footer
      %s22 = sadd.s32 1, %s18
    $region7: #{tpu_custom_call.1} parent=1 // loop_footer_branch
      %17 = sbr.rel target = $region3
    $region8: #{tpu_custom_call.1} parent=1 // loop_exit
      _
    %1161 = vsyncpa [#allocation5], 1
    %s1162 = scalar_lea.sflag [#allocation5], 1
    %1163 = vsyncpa %s1162, 1
    %1164 = vsyncpa [#allocation8], 1
    %1165 = vsyncpa [#allocation6], 1
    %s1166 = scalar_lea.sflag [#allocation6], 1
    %1167 = vsyncpa %s1166, 1

</llo_original>
